<compile_context>
chip_gen: v5e
topology: v5e:2x2
jax: 0.10.0
libtpu: 0.0.40
codegen_flags: <defaults>
</compile_context>

<pallas_src>
import jax
import jax.numpy as jnp
import numpy as np
from jax.experimental import pallas as pl
from jax.experimental.pallas import tpu as pltpu

NEG_SLOPE = 0.01  # torch.nn.LeakyReLU default


def _leaky_relu(x):
    return jnp.where(x > 0, x, NEG_SLOPE * x)


def _round_up(v, m):
    return ((v + m - 1) // m) * m


def _cdiv(a, b):
    return -(-a // b)


# ---------------------------------------------------------------------------
# Fused kernel: attention aggregation + bag head, TB bags per grid step.
# ---------------------------------------------------------------------------
def mil_fused_kernel(x_ref, mask_ref, wtr_ref, btr_ref, wq_ref, bq_ref,
                     w1_ref, b1_ref, w2_ref, b2_ref,
                     att_ref, y_ref):
    TB, I, N = x_ref.shape
    x = x_ref[...]                                            # (TB, I, N) bf16
    x2 = x.reshape(TB * I, N)                                 # flat rows -> fill MXU

    # keys = LeakyReLU(x @ W_tr + b_tr): ONE bf16 MXU matmul, f32 accumulate.
    keys = jnp.dot(x2, wtr_ref[...],
                   preferred_element_type=jnp.float32) + btr_ref[...]     # (TB*I, N) f32
    keys = _leaky_relu(keys)

    # scores = keys . w_q + b_q  via VPU mul + lane reduce (no 1-column matmul).
    scores = jnp.sum(keys.reshape(TB, I, N) * wq_ref[...], axis=-1) + bq_ref[0]  # (TB, I)
    # Mask padded instances / padded dummy bags before the softmax.
    scores = jnp.where(mask_ref[...] > 0, scores, -1e30)

    # Per-bag softmax over the instance axis; exact division so rows sum to 1.
    m = jnp.max(scores, axis=-1, keepdims=True)               # (TB, 1)
    e = jnp.exp(scores - m)                                   # (TB, I)
    att = e / jnp.sum(e, axis=-1, keepdims=True)              # (TB, I) f32
    att_ref[...] = att.T                                      # lane-dense (I, TB) store

    # Bag feature: feat_b = sum_i att_bi * x_bi   (einsum 'i,ij->j' per bag).
    feat = jnp.sum(att[:, :, None] * x.astype(jnp.float32), axis=1)       # (TB, N) f32

    # Fused bag head: Linear -> LeakyReLU -> [dropout = id] -> Linear -> Sigmoid.
    z = jnp.dot(feat, w1_ref[...],
                preferred_element_type=jnp.float32) + b1_ref[...]         # (TB, n_mid_p)
    z = _leaky_relu(z)
    logit = jnp.sum(z * w2_ref[...], axis=-1, keepdims=True) + b2_ref[0]  # (TB, 1)
    y_ref[...] = (1.0 / (1.0 + jnp.exp(-logit))).T                        # (1, TB) store


# ---------------------------------------------------------------------------
# Block-size picker
# ---------------------------------------------------------------------------
def _pick_bag_block(B, I, N, x_bytes=2, target_rows=4096, max_block_bytes=4 << 20):
    """Returns (TB, B_pad). TB bags per grid step, batch padded to B_pad."""
    # Upper bound on bags/step from the MXU-row target and an x-block byte cap
    # (4 MiB keeps the double-buffered block + f32 intermediates well under
    # v7x's 64 MiB VMEM; v5e/v6e have more headroom).
    tb_cap = max(1, min(target_rows // max(I, 1),
                        max_block_bytes // max(I * N * x_bytes, 1)))
    # Keep >= 2 grid steps for big batches so v7x's 2 TCs both get work.
    if B >= 256:
        tb_cap = min(tb_cap, B // 2)
    if tb_cap >= B:
        tb = _round_up(B, 8)          # single step: block == full (padded) array
        return tb, tb
    # Multi-step: TB sits in the lane dim of the att / y outputs -> multiple of 128.
    tb = max(128, (tb_cap // 128) * 128)
    n_steps = _cdiv(B, tb)
    return tb, n_steps * tb


# ---------------------------------------------------------------------------
# Wrapper
# ---------------------------------------------------------------------------
def mil_nn_forward(bag_features, params, bag_mask=None):
    """bag_features: (B, I, N) dense batch of bags (padded to I instances).
    bag_mask: optional (B, I) float mask (1 = valid instance, 0 = padding).
    Returns (y_pred (B, 1), att (B, I), bag_keys)."""
    B, I, N = bag_features.shape
    n_mid = params["w1"].shape[1]
    n_mid_p = _round_up(n_mid, 128)

    if bag_mask is None:
        bag_mask = jnp.ones((B, I), jnp.float32)

    TB, B_pad = _pick_bag_block(B, I, N)
    grid = (B_pad // TB,)

    # bf16 for the dominant HBM stream + MXU operands; pad batch with masked
    # dummy bags so the grid tiles evenly.
    x = bag_features.astype(jnp.bfloat16)
    mask = bag_mask.astype(jnp.float32)
    if B_pad != B:
        x = jnp.pad(x, ((0, B_pad - B), (0, 0), (0, 0)))
        mask = jnp.pad(mask, ((0, B_pad - B), (0, 0)))

    w_tr = params["w_tr"].astype(jnp.bfloat16)
    b_tr = params["b_tr"].astype(jnp.float32)
    w_q = params["w_q"].astype(jnp.float32)
    b_q = params["b_q"].astype(jnp.float32)
    b_2 = params["b2"].astype(jnp.float32)
    # Zero-pad head width to full 128-lane vregs (zero pads keep the logit exact).
    w1 = jnp.pad(params["w1"].astype(jnp.float32), ((0, 0), (0, n_mid_p - n_mid)))
    b1 = jnp.pad(params["b1"].astype(jnp.float32), ((0, 0), (0, n_mid_p - n_mid)))
    w2 = jnp.pad(params["w2"].astype(jnp.float32), ((0, 0), (0, n_mid_p - n_mid)))

    # Rough VMEM budget (double-buffered blocks + f32 intermediates), clamped
    # so it works on v5e's small scoped default and v7x's 64 MiB physical VMEM.
    f32 = 4
    xblk = TB * I * N * 2
    wgt = N * N * 2 + 3 * N * f32 + (N + 2) * n_mid_p * f32
    outs = (I + 1) * TB * f32
    interm = 3 * TB * I * N * f32
    est = 2 * (xblk + TB * I * f32 + wgt + outs) + interm
    vmem_limit = int(min(48 * 1024 * 1024, max(32 * 1024 * 1024, 2 * est)))

    att_t, y_row = pl.pallas_call(
        mil_fused_kernel,
        out_shape=(jax.ShapeDtypeStruct((I, B_pad), jnp.float32),
                   jax.ShapeDtypeStruct((1, B_pad), jnp.float32)),
        grid_spec=pltpu.PrefetchScalarGridSpec(
            num_scalar_prefetch=0,
            grid=grid,
            in_specs=[
                pl.BlockSpec((TB, I, N), lambda b: (b, 0, 0)),            # x (bf16)
                pl.BlockSpec((TB, I), lambda b: (b, 0)),                  # mask
                pl.BlockSpec((N, N), lambda b: (0, 0)),                   # W_tr (bf16)
                pl.BlockSpec((1, N), lambda b: (0, 0)),                   # b_tr
                pl.BlockSpec((1, N), lambda b: (0, 0)),                   # w_q (row)
                pl.BlockSpec(memory_space=pltpu.MemorySpace.SMEM),        # b_q
                pl.BlockSpec((N, n_mid_p), lambda b: (0, 0)),             # W1
                pl.BlockSpec((1, n_mid_p), lambda b: (0, 0)),             # b1
                pl.BlockSpec((1, n_mid_p), lambda b: (0, 0)),             # w2 (row)
                pl.BlockSpec(memory_space=pltpu.MemorySpace.SMEM),        # b2
            ],
            out_specs=[
                pl.BlockSpec((I, TB), lambda b: (0, b)),                  # att^T (lane-dense)
                pl.BlockSpec((1, TB), lambda b: (0, b)),                  # y row (lane-dense)
            ],
        ),
        compiler_params=pltpu.CompilerParams(
            dimension_semantics=("parallel",),
            vmem_limit_bytes=vmem_limit),
    )(x, mask, w_tr, b_tr, w_q, b_q, w1, b1, w2, b_2)

    att = att_t[:, :B].T              # (B, I)
    y_pred = y_row[0, :B][:, None]    # (B, 1)
    # Per-bag dict (PyTorch-style API) can be built lazily on the host if
    # needed; we return the dense (B, I) attention array instead.
    bag_keys = tuple(range(B))
    return y_pred, att, bag_keys


# ---------------------------------------------------------------------------
# Pure-JAX reference for correctness checking
# ---------------------------------------------------------------------------
def reference_forward(x, p, mask):
    keys = jnp.einsum("bin,nm->bim", x, p["w_tr"]) + p["b_tr"]
    keys = jax.nn.leaky_relu(keys, NEG_SLOPE)
    scores = jnp.einsum("bim,m->bi", keys, p["w_q"][0]) + p["b_q"][0]
    scores = jnp.where(mask > 0, scores, -jnp.inf)
    att = jax.nn.softmax(scores, axis=-1)
    feat = jnp.einsum("bi,bin->bn", att, x)
    z = jax.nn.leaky_relu(feat @ p["w1"] + p["b1"], NEG_SLOPE)
    y = jax.nn.sigmoid(jnp.einsum("bm,m->b", z, p["w2"][0])[:, None] + p["b2"][0])
    return y, att


if __name__ == "__main__":
    # Small shapes: 4 bags, 8 instances per bag, feature dim 128, hidden 64.
    B, I, N, N_MID, N_CLASSES = 4, 8, 128, 64, 1

    key = jax.random.PRNGKey(0)
    ks = jax.random.split(key, 9)

    # Weights stored pre-transposed (in, out); query / second-layer weights as rows.
    params = {
        "w_tr": jax.random.normal(ks[0], (N, N), jnp.float32) * 0.02,
        "b_tr": jax.random.normal(ks[1], (1, N), jnp.float32) * 0.02,
        "w_q":  jax.random.normal(ks[2], (1, N), jnp.float32) * 0.02,
        "b_q":  jax.random.normal(ks[3], (1,), jnp.float32) * 0.02,
        "w1":   jax.random.normal(ks[4], (N, N_MID), jnp.float32) * 0.02,
        "b1":   jax.random.normal(ks[5], (1, N_MID), jnp.float32) * 0.02,
        "w2":   jax.random.normal(ks[6], (1, N_MID), jnp.float32) * 0.02,
        "b2":   jax.random.normal(ks[7], (1,), jnp.float32) * 0.02,
    }

    bag_features = jax.random.normal(ks[8], (B, I, N), jnp.float32)

    # Tolerances account for bf16 MXU inputs (f32 accumulation) in the kernel.
    RTOL, ATOL = 1e-2, 1e-3

    # --- full bags ---------------------------------------------------------
    y_pred, att, bag_keys = mil_nn_forward(bag_features, params)
    y_pred = jax.block_until_ready(y_pred)

    mask_full = jnp.ones((B, I), jnp.float32)
    y_ref, att_ref = reference_forward(bag_features, params, mask_full)
    np.testing.assert_allclose(np.asarray(y_pred), np.asarray(y_ref),
                               rtol=RTOL, atol=ATOL)
    np.testing.assert_allclose(np.asarray(att), np.asarray(att_ref),
                               rtol=RTOL, atol=ATOL)

    # --- variable-length bags (padding masked out) -------------------------
    lens = jnp.array([8, 5, 8, 3], jnp.int32)
    mask = (jnp.arange(I)[None, :] < lens[:, None]).astype(jnp.float32)
    y2, att2, _ = mil_nn_forward(bag_features, params, mask)
    y2 = jax.block_until_ready(y2)
    y2_ref, att2_ref = reference_forward(bag_features, params, mask)
    np.testing.assert_allclose(np.asarray(y2), np.asarray(y2_ref),
                               rtol=RTOL, atol=ATOL)
    np.testing.assert_allclose(np.asarray(att2), np.asarray(att2_ref),
                               rtol=RTOL, atol=ATOL)

    print("KERNEL_OK")
</pallas_src>

<mosaic_0001>
module attributes {stable_mosaic.version = 11 : i64} {
  func.func @mil_fused_kernel(%arg0: i32, %arg1: memref<8x8x128xbf16, #tpu.memory_space<vmem>>, %arg2: memref<8x8xf32, #tpu.memory_space<vmem>>, %arg3: memref<128x128xbf16, #tpu.memory_space<vmem>>, %arg4: memref<1x128xf32, #tpu.memory_space<vmem>>, %arg5: memref<1x128xf32, #tpu.memory_space<vmem>>, %arg6: memref<1xf32, #tpu.memory_space<smem>>, %arg7: memref<128x128xf32, #tpu.memory_space<vmem>>, %arg8: memref<1x128xf32, #tpu.memory_space<vmem>>, %arg9: memref<1x128xf32, #tpu.memory_space<vmem>>, %arg10: memref<1xf32, #tpu.memory_space<smem>>, %arg11: memref<8x8xf32, #tpu.memory_space<vmem>>, %arg12: memref<1x8xf32, #tpu.memory_space<vmem>>) attributes {dimension_semantics = [#tpu.dimension_semantics<parallel>], iteration_bounds = array<i64: 1>, scalar_prefetch = 0 : i64, scratch_operands = 0 : i64, tpu.core_type = #tpu.core_type<tc>, window_params = [{transform_indices = @transform_0, window_bounds = array<i64: 8, 8, 128>}, {transform_indices = @transform_1, window_bounds = array<i64: 8, 8>}, {pipeline_mode = #tpu.pipeline_mode<synchronous>, transform_indices = @transform_2, window_bounds = array<i64: 128, 128>}, {pipeline_mode = #tpu.pipeline_mode<synchronous>, transform_indices = @transform_3, window_bounds = array<i64: 1, 128>}, {pipeline_mode = #tpu.pipeline_mode<synchronous>, transform_indices = @transform_4, window_bounds = array<i64: 1, 128>}, {transform_indices = @transform_5, window_bounds = array<i64: 1>}, {pipeline_mode = #tpu.pipeline_mode<synchronous>, transform_indices = @transform_6, window_bounds = array<i64: 128, 128>}, {pipeline_mode = #tpu.pipeline_mode<synchronous>, transform_indices = @transform_7, window_bounds = array<i64: 1, 128>}, {pipeline_mode = #tpu.pipeline_mode<synchronous>, transform_indices = @transform_8, window_bounds = array<i64: 1, 128>}, {transform_indices = @transform_9, window_bounds = array<i64: 1>}, {transform_indices = @transform_10, window_bounds = array<i64: 8, 8>}, {transform_indices = @transform_11, window_bounds = array<i64: 1, 8>}]} {
    %c0 = arith.constant 0 : index
    %c0_0 = arith.constant 0 : index
    %c0_1 = arith.constant 0 : index
    %0 = vector.load %arg1[%c0, %c0_0, %c0_1] : memref<8x8x128xbf16, #tpu.memory_space<vmem>>, vector<8x8x128xbf16>
    %1 = vector.shape_cast %0 : vector<8x8x128xbf16> to vector<64x128xbf16>
    %c0_2 = arith.constant 0 : index
    %c0_3 = arith.constant 0 : index
    %2 = vector.load %arg3[%c0_2, %c0_3] : memref<128x128xbf16, #tpu.memory_space<vmem>>, vector<128x128xbf16>
    %cst = arith.constant dense<0.000000e+00> : vector<64x128xf32>
    %3 = tpu.matmul %1, %2, %cst {dimension_numbers = #tpu.dot_dimension_numbers<[1], [0], [0], [1], [0, 0, 1, 1], [], []>} : vector<64x128xbf16>, vector<128x128xbf16>, vector<64x128xf32> -> vector<64x128xf32>
    %c0_4 = arith.constant 0 : index
    %c0_5 = arith.constant 0 : index
    %4 = vector.load %arg4[%c0_4, %c0_5] : memref<1x128xf32, #tpu.memory_space<vmem>>, vector<1x128xf32>
    %5 = vector.broadcast %4 : vector<1x128xf32> to vector<64x128xf32>
    %6 = arith.addf %3, %5 : vector<64x128xf32>
    %cst_6 = arith.constant 0.000000e+00 : f32
    %7 = vector.broadcast %cst_6 : f32 to vector<64x128xf32>
    %8 = arith.cmpf ogt, %6, %7 : vector<64x128xf32>
    %cst_7 = arith.constant 0.00999999977 : f32
    %9 = vector.broadcast %cst_7 : f32 to vector<64x128xf32>
    %10 = arith.mulf %9, %6 : vector<64x128xf32>
    %11 = arith.select %8, %6, %10 : vector<64x128xi1>, vector<64x128xf32>
    %12 = vector.shape_cast %11 : vector<64x128xf32> to vector<8x8x128xf32>
    %c0_8 = arith.constant 0 : index
    %c0_9 = arith.constant 0 : index
    %13 = vector.load %arg5[%c0_8, %c0_9] : memref<1x128xf32, #tpu.memory_space<vmem>>, vector<1x128xf32>
    %14 = vector.shape_cast %13 : vector<1x128xf32> to vector<1x1x128xf32>
    %15 = vector.broadcast %14 : vector<1x1x128xf32> to vector<8x8x128xf32>
    %16 = arith.mulf %12, %15 : vector<8x8x128xf32>
    %cst_10 = arith.constant dense<0.000000e+00> : vector<8x8xf32>
    %17 = vector.multi_reduction <add>, %16, %cst_10 [2] : vector<8x8x128xf32> to vector<8x8xf32>
    %c0_11 = arith.constant 0 : index
    %18 = memref.load %arg6[%c0_11] : memref<1xf32, #tpu.memory_space<smem>>
    %19 = vector.broadcast %18 : f32 to vector<8x8xf32>
    %20 = arith.addf %17, %19 : vector<8x8xf32>
    %c0_12 = arith.constant 0 : index
    %c0_13 = arith.constant 0 : index
    %21 = vector.load %arg2[%c0_12, %c0_13] : memref<8x8xf32, #tpu.memory_space<vmem>>, vector<8x8xf32>
    %cst_14 = arith.constant 0.000000e+00 : f32
    %22 = vector.broadcast %cst_14 : f32 to vector<8x8xf32>
    %23 = arith.cmpf ogt, %21, %22 : vector<8x8xf32>
    %cst_15 = arith.constant -1.000000e+30 : f32
    %24 = vector.broadcast %cst_15 : f32 to vector<8x8xf32>
    %25 = arith.select %23, %20, %24 : vector<8x8xi1>, vector<8x8xf32>
    %cst_16 = arith.constant dense<0xFF800000> : vector<8xf32>
    %26 = vector.multi_reduction <maximumf>, %25, %cst_16 [1] : vector<8x8xf32> to vector<8xf32>
    %27 = vector.shape_cast %26 : vector<8xf32> to vector<8x1xf32>
    %28 = vector.broadcast %27 : vector<8x1xf32> to vector<8x8xf32>
    %29 = arith.subf %25, %28 : vector<8x8xf32>
    %30 = math.exp %29 : vector<8x8xf32>
    %cst_17 = arith.constant dense<0.000000e+00> : vector<8xf32>
    %31 = vector.multi_reduction <add>, %30, %cst_17 [1] : vector<8x8xf32> to vector<8xf32>
    %32 = vector.shape_cast %31 : vector<8xf32> to vector<8x1xf32>
    %33 = vector.broadcast %32 : vector<8x1xf32> to vector<8x8xf32>
    %34 = arith.divf %30, %33 : vector<8x8xf32>
    %35 = tpu.transpose %34, [1, 0] : vector<8x8xf32> -> vector<8x8xf32>
    %c0_18 = arith.constant 0 : index
    %c0_19 = arith.constant 0 : index
    %36 = vector.load %arg11[%c0_18, %c0_19] : memref<8x8xf32, #tpu.memory_space<vmem>>, vector<8x8xf32>
    tpu.vector_store %arg11[%c0_18, %c0_19], %35 {strides = array<i32>} : memref<8x8xf32, #tpu.memory_space<vmem>>, vector<8x8xf32>,
    %37 = vector.shape_cast %34 : vector<8x8xf32> to vector<8x8x1xf32>
    %38 = arith.extf %0 : vector<8x8x128xbf16> to vector<8x8x128xf32>
    %39 = vector.broadcast %37 : vector<8x8x1xf32> to vector<8x8x128xf32>
    %40 = arith.mulf %39, %38 : vector<8x8x128xf32>
    %cst_20 = arith.constant dense<0.000000e+00> : vector<8x128xf32>
    %41 = vector.multi_reduction <add>, %40, %cst_20 [1] : vector<8x8x128xf32> to vector<8x128xf32>
    %c0_21 = arith.constant 0 : index
    %c0_22 = arith.constant 0 : index
    %42 = vector.load %arg7[%c0_21, %c0_22] : memref<128x128xf32, #tpu.memory_space<vmem>>, vector<128x128xf32>
    %cst_23 = arith.constant dense<0.000000e+00> : vector<8x128xf32>
    %43 = tpu.matmul %41, %42, %cst_23 {dimension_numbers = #tpu.dot_dimension_numbers<[1], [0], [0], [1], [0, 0, 1, 1], [], []>} : vector<8x128xf32>, vector<128x128xf32>, vector<8x128xf32> -> vector<8x128xf32>
    %c0_24 = arith.constant 0 : index
    %c0_25 = arith.constant 0 : index
    %44 = vector.load %arg8[%c0_24, %c0_25] : memref<1x128xf32, #tpu.memory_space<vmem>>, vector<1x128xf32>
    %45 = vector.broadcast %44 : vector<1x128xf32> to vector<8x128xf32>
    %46 = arith.addf %43, %45 : vector<8x128xf32>
    %cst_26 = arith.constant 0.000000e+00 : f32
    %47 = vector.broadcast %cst_26 : f32 to vector<8x128xf32>
    %48 = arith.cmpf ogt, %46, %47 : vector<8x128xf32>
    %cst_27 = arith.constant 0.00999999977 : f32
    %49 = vector.broadcast %cst_27 : f32 to vector<8x128xf32>
    %50 = arith.mulf %49, %46 : vector<8x128xf32>
    %51 = arith.select %48, %46, %50 : vector<8x128xi1>, vector<8x128xf32>
    %c0_28 = arith.constant 0 : index
    %c0_29 = arith.constant 0 : index
    %52 = vector.load %arg9[%c0_28, %c0_29] : memref<1x128xf32, #tpu.memory_space<vmem>>, vector<1x128xf32>
    %53 = vector.broadcast %52 : vector<1x128xf32> to vector<8x128xf32>
    %54 = arith.mulf %51, %53 : vector<8x128xf32>
    %cst_30 = arith.constant dense<0.000000e+00> : vector<8xf32>
    %55 = vector.multi_reduction <add>, %54, %cst_30 [1] : vector<8x128xf32> to vector<8xf32>
    %56 = vector.shape_cast %55 : vector<8xf32> to vector<8x1xf32>
    %c0_31 = arith.constant 0 : index
    %57 = memref.load %arg10[%c0_31] : memref<1xf32, #tpu.memory_space<smem>>
    %58 = vector.broadcast %57 : f32 to vector<8x1xf32>
    %59 = arith.addf %56, %58 : vector<8x1xf32>
    %cst_32 = arith.constant 0.000000e+00 : f32
    %60 = vector.broadcast %cst_32 : f32 to vector<8x1xf32>
    %61 = arith.subf %60, %59 : vector<8x1xf32>
    %62 = math.exp %61 : vector<8x1xf32>
    %cst_33 = arith.constant 1.000000e+00 : f32
    %63 = vector.broadcast %cst_33 : f32 to vector<8x1xf32>
    %64 = arith.addf %63, %62 : vector<8x1xf32>
    %cst_34 = arith.constant 1.000000e+00 : f32
    %65 = vector.broadcast %cst_34 : f32 to vector<8x1xf32>
    %66 = arith.divf %65, %64 : vector<8x1xf32>
    %67 = tpu.transpose %66, [1, 0] : vector<8x1xf32> -> vector<1x8xf32>
    %c0_35 = arith.constant 0 : index
    %c0_36 = arith.constant 0 : index
    %68 = vector.load %arg12[%c0_35, %c0_36] : memref<1x8xf32, #tpu.memory_space<vmem>>, vector<1x8xf32>
    tpu.vector_store %arg12[%c0_35, %c0_36], %67 {strides = array<i32>} : memref<1x8xf32, #tpu.memory_space<vmem>>, vector<1x8xf32>,
    return
  }
  func.func @transform_0(%arg0: i32) -> (i32, i32, i32) {
    %c0_i32 = arith.constant 0 : i32
    %c0_i32_0 = arith.constant 0 : i32
    %c0_i32_1 = arith.constant 0 : i32
    return %arg0, %c0_i32, %c0_i32_0 : i32, i32, i32
  }
  func.func @transform_1(%arg0: i32) -> (i32, i32) {
    %c0_i32 = arith.constant 0 : i32
    %c0_i32_0 = arith.constant 0 : i32
    return %arg0, %c0_i32 : i32, i32
  }
  func.func @transform_2(%arg0: i32) -> (i32, i32) {
    %c0_i32 = arith.constant 0 : i32
    %c0_i32_0 = arith.constant 0 : i32
    %c0_i32_1 = arith.constant 0 : i32
    return %c0_i32, %c0_i32_0 : i32, i32
  }
  func.func @transform_3(%arg0: i32) -> (i32, i32) {
    %c0_i32 = arith.constant 0 : i32
    %c0_i32_0 = arith.constant 0 : i32
    %c0_i32_1 = arith.constant 0 : i32
    return %c0_i32, %c0_i32_0 : i32, i32
  }
  func.func @transform_4(%arg0: i32) -> (i32, i32) {
    %c0_i32 = arith.constant 0 : i32
    %c0_i32_0 = arith.constant 0 : i32
    %c0_i32_1 = arith.constant 0 : i32
    return %c0_i32, %c0_i32_0 : i32, i32
  }
  func.func @transform_5(%arg0: i32) -> i32 {
    %c0_i32 = arith.constant 0 : i32
    %c0_i32_0 = arith.constant 0 : i32
    return %c0_i32 : i32
  }
  func.func @transform_6(%arg0: i32) -> (i32, i32) {
    %c0_i32 = arith.constant 0 : i32
    %c0_i32_0 = arith.constant 0 : i32
    %c0_i32_1 = arith.constant 0 : i32
    return %c0_i32, %c0_i32_0 : i32, i32
  }
  func.func @transform_7(%arg0: i32) -> (i32, i32) {
    %c0_i32 = arith.constant 0 : i32
    %c0_i32_0 = arith.constant 0 : i32
    %c0_i32_1 = arith.constant 0 : i32
    return %c0_i32, %c0_i32_0 : i32, i32
  }
  func.func @transform_8(%arg0: i32) -> (i32, i32) {
    %c0_i32 = arith.constant 0 : i32
    %c0_i32_0 = arith.constant 0 : i32
    %c0_i32_1 = arith.constant 0 : i32
    return %c0_i32, %c0_i32_0 : i32, i32
  }
  func.func @transform_9(%arg0: i32) -> i32 {
    %c0_i32 = arith.constant 0 : i32
    %c0_i32_0 = arith.constant 0 : i32
    return %c0_i32 : i32
  }
  func.func @transform_10(%arg0: i32) -> (i32, i32) {
    %c0_i32 = arith.constant 0 : i32
    %c0_i32_0 = arith.constant 0 : i32
    return %c0_i32, %arg0 : i32, i32
  }
  func.func @transform_11(%arg0: i32) -> (i32, i32) {
    %c0_i32 = arith.constant 0 : i32
    %c0_i32_0 = arith.constant 0 : i32
    return %c0_i32, %arg0 : i32, i32
  }
}

</mosaic_0001>

<llo_original>
// kernel: tpu_custom_call.1
$region0: #{tpu_custom_call.1}
  #allocation0 [shape = 'u32[]', space=smem, size = 0x4, offset = 0x4, fixed_abs, tag = 'smem constant byte address 0x4 - core index']
  #allocation1 [shape = 'u32[72,128]{1,0:T(1,128)}', space=vmem, size = 0x9000, scoped, tag = 'internal scratch']
  #allocation2 [shape = 'f32[1]{0:T(128)S(6)}', space=smem, size = 0x200, scoped, tag = 'scoped memory for tpu_custom_call.1']
  #allocation3 [shape = 'f32[1]{0:T(128)S(6)}', space=smem, size = 0x200, scoped, tag = 'scoped memory for tpu_custom_call.1']
  %s0 = inlined_call_operand.hbm [shape: bf16[8,8,128], index: 0, kind: input, shape index: {}]
  %s1 = inlined_call_operand.hbm [shape: f32[8,8], index: 1, kind: input, shape index: {}]
  %s2 = inlined_call_operand.hbm [shape: bf16[128,128], index: 2, kind: input, shape index: {}]
  %s3 = inlined_call_operand.vmem [shape: f32[1,128], index: 3, kind: input, shape index: {}]
  %s4 = inlined_call_operand.vmem [shape: f32[1,128], index: 4, kind: input, shape index: {}]
  %s5 = inlined_call_operand.<no memory space> [shape: f32[1], index: 5, kind: input, shape index: {}]
  %s6 = inlined_call_operand.hbm [shape: f32[128,128], index: 6, kind: input, shape index: {}]
  %s7 = inlined_call_operand.vmem [shape: f32[1,128], index: 7, kind: input, shape index: {}]
  %s8 = inlined_call_operand.vmem [shape: f32[1,128], index: 8, kind: input, shape index: {}]
  %s9 = inlined_call_operand.<no memory space> [shape: f32[1], index: 9, kind: input, shape index: {}]
  %s10 = inlined_call_operand.hbm [shape: f32[8,8], index: 10, kind: output, shape index: {0}]
  %s11 = inlined_call_operand.hbm [shape: f32[1,8], index: 11, kind: output, shape index: {1}]
  %12 = xla_tuple %s10, %s11
  %s13 = sld [smem:[#allocation0]]
  $region74: #{tpu_custom_call.1} parent=0
    _
  %s15 = ssub.s32 1, %s13
  %s16 = scalar_select 0, %s15, %s13
  %17 = sst [smem:[#allocation2]] %s5
  %18 = sst [smem:[#allocation3]] %s9
  $region1: #{tpu_custom_call.1} parent=0
    #allocation4 [shape = 'u8[16384]{0}', space=vmem, size = 0x4000, scoped, tag = 'input window, operand 0, single buffered']
    #allocation5 [shape = 's32[1]{0}', space=sflag, size = 0x4, scoped, tag = 'scoped memory for tpu_custom_call.1']
    #allocation6 [shape = 's32[1]{0}', space=sflag, size = 0x4, scoped, tag = 'scoped memory for tpu_custom_call.1']
    #allocation7 [shape = 'u8[4096]{0}', space=vmem, size = 0x1000, scoped, tag = 'input window, operand 1, single buffered']
    #allocation8 [shape = 's32[1]{0}', space=sflag, size = 0x4, scoped, tag = 'scoped memory for tpu_custom_call.1']
    #allocation9 [shape = 'u8[32768]{0}', space=vmem, size = 0x8000, scoped, tag = 'input window, operand 2, single buffered']
    #allocation10 [shape = 'u8[65536]{0}', space=vmem, size = 0x10000, scoped, tag = 'input window, operand 6, single buffered']
    #allocation11 [shape = 's32[1]{0}', space=sflag, size = 0x4, scoped, tag = 'scoped memory for tpu_custom_call.1']
    #allocation12 [shape = 'u8[4096]{0}', space=vmem, size = 0x1000, scoped, tag = 'output window, operand 0, single buffered']
    #allocation13 [shape = 'u8[512]{0}', space=vmem, size = 0x400, scoped, tag = 'output window, operand 1, single buffered']
    #allocation14 [shape = 's32[1]{0}', space=sflag, size = 0x4, scoped, tag = 'scoped memory for tpu_custom_call.1']
    %19 = vsyncpa [#allocation5], 0
    %20 = vsyncpa [#allocation8], 0
    %21 = vsyncpa [#allocation11], 0
    %22 = vsyncpa [#allocation6], 0
    %23 = vsyncpa [#allocation14], 0
    // Predicated region
    $region2: #{tpu_custom_call.1} parent=1 // pred_check
      _
    $region3: #{tpu_custom_call.1} parent=1 // pred_check_branch
      %25 = sbr.rel (0) target = $region5
    $region4: #{tpu_custom_call.1} parent=1 // pred_region
      %27 = vsyncadd [#allocation5], 0
      %s28 = sshll.u32 %s0, 4
      %s29 = int_to_ptr.hbm [resolvable:$true] %s28
      %s30 = sshll.u32 [#allocation4], 4
      %s31 = int_to_ptr.vmem [resolvable:$true] %s30
      %36 = dma.hbm_to_vmem [thread:$0]  %s29, 512, %s31, [#allocation5], 64, 64, 4
    $region5: #{tpu_custom_call.1} parent=1 // pred_fallthru
      _
    // Predicated region
    $region6: #{tpu_custom_call.1} parent=1 // pred_check
      _
    $region7: #{tpu_custom_call.1} parent=1 // pred_check_branch
      %38 = sbr.rel (0) target = $region9
    $region8: #{tpu_custom_call.1} parent=1 // pred_region
      %40 = vsyncadd [#allocation8], 0
      %s42 = sshll.u32 %s1, 4
      %s43 = int_to_ptr.hbm [resolvable:$true] %s42
      %s44 = sshll.u32 [#allocation7], 4
      %s45 = int_to_ptr.vmem [resolvable:$true] %s44
      %47 = dma.hbm_to_vmem [thread:$0]  %s43, 128, %s45, [#allocation8]
    $region9: #{tpu_custom_call.1} parent=1 // pred_fallthru
      _
    // Predicated region
    $region10: #{tpu_custom_call.1} parent=1 // pred_check
      _
    $region11: #{tpu_custom_call.1} parent=1 // pred_check_branch
      %49 = sbr.rel (0) target = $region13
    $region12: #{tpu_custom_call.1} parent=1 // pred_region
      %51 = vsyncadd [#allocation8], 0
      %s52 = sshll.u32 %s2, 4
      %s53 = int_to_ptr.hbm [resolvable:$true] %s52
      %s54 = sshll.u32 [#allocation9], 4
      %s55 = int_to_ptr.vmem [resolvable:$true] %s54
      %60 = dma.hbm_to_vmem [thread:$0]  %s53, 1024, %s55, [#allocation8], 64, 64, 4
    $region13: #{tpu_custom_call.1} parent=1 // pred_fallthru
      _
    // Predicated region
    $region14: #{tpu_custom_call.1} parent=1 // pred_check
      _
    $region15: #{tpu_custom_call.1} parent=1 // pred_check_branch
      %62 = sbr.rel (0) target = $region17
    $region16: #{tpu_custom_call.1} parent=1 // pred_region
      _
    $region17: #{tpu_custom_call.1} parent=1 // pred_fallthru
      _
    // Predicated region
    $region18: #{tpu_custom_call.1} parent=1 // pred_check
      _
    $region19: #{tpu_custom_call.1} parent=1 // pred_check_branch
      %64 = sbr.rel (0) target = $region21
    $region20: #{tpu_custom_call.1} parent=1 // pred_region
      _
    $region21: #{tpu_custom_call.1} parent=1 // pred_fallthru
      _
    // Predicated region
    $region22: #{tpu_custom_call.1} parent=1 // pred_check
      _
    $region23: #{tpu_custom_call.1} parent=1 // pred_check_branch
      %66 = sbr.rel (0) target = $region25
    $region24: #{tpu_custom_call.1} parent=1 // pred_region
      _
    $region25: #{tpu_custom_call.1} parent=1 // pred_fallthru
      _
    // Predicated region
    $region26: #{tpu_custom_call.1} parent=1 // pred_check
      _
    $region27: #{tpu_custom_call.1} parent=1 // pred_check_branch
      %68 = sbr.rel (0) target = $region29
    $region28: #{tpu_custom_call.1} parent=1 // pred_region
      %70 = vsyncadd [#allocation11], 0
      %s71 = sshll.u32 %s6, 4
      %s72 = int_to_ptr.hbm [resolvable:$true] %s71
      %s73 = sshll.u32 [#allocation10], 4
      %s74 = int_to_ptr.vmem [resolvable:$true] %s73
      %79 = dma.hbm_to_vmem [thread:$0]  %s72, 2048, %s74, [#allocation11], 128, 128, 8
    $region29: #{tpu_custom_call.1} parent=1 // pred_fallthru
      _
    // Predicated region
    $region30: #{tpu_custom_call.1} parent=1 // pred_check
      _
    $region31: #{tpu_custom_call.1} parent=1 // pred_check_branch
      %81 = sbr.rel (0) target = $region33
    $region32: #{tpu_custom_call.1} parent=1 // pred_region
      _
    $region33: #{tpu_custom_call.1} parent=1 // pred_fallthru
      _
    // Predicated region
    $region34: #{tpu_custom_call.1} parent=1 // pred_check
      _
    $region35: #{tpu_custom_call.1} parent=1 // pred_check_branch
      %83 = sbr.rel (0) target = $region37
    $region36: #{tpu_custom_call.1} parent=1 // pred_region
      _
    $region37: #{tpu_custom_call.1} parent=1 // pred_fallthru
      _
    // Predicated region
    $region38: #{tpu_custom_call.1} parent=1 // pred_check
      _
    $region39: #{tpu_custom_call.1} parent=1 // pred_check_branch
      %85 = sbr.rel (0) target = $region41
    $region40: #{tpu_custom_call.1} parent=1 // pred_region
      _
    $region41: #{tpu_custom_call.1} parent=1 // pred_fallthru
      _
    // Predicated region
    $region42: #{tpu_custom_call.1} parent=1 // pred_check
      _
    $region43: #{tpu_custom_call.1} parent=1 // pred_check_branch
      %87 = sbr.rel (0) target = $region45
    $region44: #{tpu_custom_call.1} parent=1 // pred_region
      %89 = dma.done [#allocation5], 512
    $region45: #{tpu_custom_call.1} parent=1 // pred_fallthru
      _
    // Predicated region
    $region46: #{tpu_custom_call.1} parent=1 // pred_check
      _
    $region47: #{tpu_custom_call.1} parent=1 // pred_check_branch
      %91 = sbr.rel (0) target = $region49
    $region48: #{tpu_custom_call.1} parent=1 // pred_region
      %93 = dma.done [#allocation8], 128
    $region49: #{tpu_custom_call.1} parent=1 // pred_fallthru
      _
    // Predicated region
    $region50: #{tpu_custom_call.1} parent=1 // pred_check
      _
    $region51: #{tpu_custom_call.1} parent=1 // pred_check_branch
      %95 = sbr.rel (0) target = $region53
    $region52: #{tpu_custom_call.1} parent=1 // pred_region
      %97 = dma.done [#allocation8], 1024
    $region53: #{tpu_custom_call.1} parent=1 // pred_fallthru
      _
    // Predicated region
    $region54: #{tpu_custom_call.1} parent=1 // pred_check
      _
    $region55: #{tpu_custom_call.1} parent=1 // pred_check_branch
      %99 = sbr.rel (0) target = $region57
    $region56: #{tpu_custom_call.1} parent=1 // pred_region
      %101 = dma.done [#allocation11], 2048
    $region57: #{tpu_custom_call.1} parent=1 // pred_fallthru
      _
    %v102 = vld [vmem:[#allocation4] sm:$0xf]
    %v103 = vld [vmem:[#allocation4 + $0x4] sm:$0xf]
    %v104 = vld [vmem:[#allocation4 + $0x8] sm:$0xf]
    %v105 = vld [vmem:[#allocation4 + $0xc] sm:$0xf]
    %v106 = vld [vmem:[#allocation4 + $0x10] sm:$0xf]
    %v107 = vld [vmem:[#allocation4 + $0x14] sm:$0xf]
    %v108 = vld [vmem:[#allocation4 + $0x18] sm:$0xf]
    %v109 = vld [vmem:[#allocation4 + $0x1c] sm:$0xf]
    %v110 = vld [vmem:[#allocation9] sm:$0xf]
    %v111 = vld [vmem:[#allocation9 + $0x4] sm:$0xf]
    %v112 = vld [vmem:[#allocation9 + $0x8] sm:$0xf]
    %v113 = vld [vmem:[#allocation9 + $0xc] sm:$0xf]
    %v114 = vld [vmem:[#allocation9 + $0x10] sm:$0xf]
    %v115 = vld [vmem:[#allocation9 + $0x14] sm:$0xf]
    %v116 = vld [vmem:[#allocation9 + $0x18] sm:$0xf]
    %v117 = vld [vmem:[#allocation9 + $0x1c] sm:$0xf]
    %v118 = vld [vmem:[#allocation9 + $0x20] sm:$0xf]
    %v119 = vld [vmem:[#allocation9 + $0x24] sm:$0xf]
    %v120 = vld [vmem:[#allocation9 + $0x28] sm:$0xf]
    %v121 = vld [vmem:[#allocation9 + $0x2c] sm:$0xf]
    %v122 = vld [vmem:[#allocation9 + $0x30] sm:$0xf]
    %v123 = vld [vmem:[#allocation9 + $0x34] sm:$0xf]
    %v124 = vld [vmem:[#allocation9 + $0x38] sm:$0xf]
    %v125 = vld [vmem:[#allocation9 + $0x3c] sm:$0xf]
    %v126 = vld [vmem:[%s3] sm:$0x1]
    %v128 = vperm.slane %v126, 0
    %v138 = vunpack.c.l.b16 %v102
    %v139 = vunpack.c.l.b16 %v103
    %v140 = vunpack.c.l.b16 %v104
    %v141 = vunpack.c.l.b16 %v105
    %v142 = vunpack.c.l.b16 %v106
    %v143 = vunpack.c.l.b16 %v107
    %v144 = vunpack.c.l.b16 %v108
    %v145 = vunpack.c.l.b16 %v109
    %v146 = vpack.c.b16 %v139, %v138
    %v147 = vpack.c.b16 %v141, %v140
    %v148 = vpack.c.b16 %v143, %v142
    %v149 = vpack.c.b16 %v145, %v144
    %v170 = vunpack.c.l.b16 %v110
    %v171 = vunpack.c.l.b16 %v111
    %v172 = vunpack.c.l.b16 %v112
    %v173 = vunpack.c.l.b16 %v113
    %v174 = vunpack.c.l.b16 %v114
    %v175 = vunpack.c.l.b16 %v115
    %v176 = vunpack.c.l.b16 %v116
    %v177 = vunpack.c.l.b16 %v117
    %v178 = vunpack.c.l.b16 %v118
    %v179 = vunpack.c.l.b16 %v119
    %v180 = vunpack.c.l.b16 %v120
    %v181 = vunpack.c.l.b16 %v121
    %v182 = vunpack.c.l.b16 %v122
    %v183 = vunpack.c.l.b16 %v123
    %v184 = vunpack.c.l.b16 %v124
    %v185 = vunpack.c.l.b16 %v125
    %v186 = vpack.c.b16 %v171, %v170
    %v187 = vpack.c.b16 %v173, %v172
    %v188 = vpack.c.b16 %v175, %v174
    %v189 = vpack.c.b16 %v177, %v176
    %v190 = vpack.c.b16 %v179, %v178
    %v191 = vpack.c.b16 %v181, %v180
    %v192 = vpack.c.b16 %v183, %v182
    %v193 = vpack.c.b16 %v185, %v184
    %202 = vmatpush.bf16.msra.mxu0 %v193
    %203 = vmatpush.bf16.msra.mxu0 %v192
    %204 = vmatpush.bf16.msra.mxu0 %v191
    %205 = vmatpush.bf16.msra.mxu0 %v190
    %206 = vmatpush.bf16.msra.mxu0 %v189
    %207 = vmatpush.bf16.msra.mxu0 %v188
    %208 = vmatpush.bf16.msra.mxu0 %v187
    %209 = vmatpush.bf16.msra.mxu0 %v186
    %210 = vmatmul.bf16.gmra.mxu0 %v146
    %v211 = vpop.f32.mrf.mxu0
    %v212 = vadd.f32 %v128, %v211
    %v213 = vpop.f32.mrf.mxu0
    %v214 = vadd.f32 %v128, %v213
    %215 = vmatmul.bf16.gmra.mxu0 %v147
    %v216 = vpop.f32.mrf.mxu0
    %v217 = vadd.f32 %v128, %v216
    %v218 = vpop.f32.mrf.mxu0
    %v219 = vadd.f32 %v128, %v218
    %220 = vmatmul.bf16.gmra.mxu0 %v148
    %v221 = vpop.f32.mrf.mxu0
    %v222 = vadd.f32 %v128, %v221
    %v223 = vpop.f32.mrf.mxu0
    %v224 = vadd.f32 %v128, %v223
    %225 = vmatmul.bf16.gmra.mxu0 %v149
    %v226 = vpop.f32.mrf.mxu0
    %v227 = vadd.f32 %v128, %v226
    %v228 = vpop.f32.mrf.mxu0
    %v229 = vadd.f32 %v128, %v228
    %230 = vdwg.mxu0
    %vm231 = vcmp.gt.f32.partialorder %v212, 0.0
    %vm232 = vcmp.gt.f32.partialorder %v214, 0.0
    %vm233 = vcmp.gt.f32.partialorder %v217, 0.0
    %vm234 = vcmp.gt.f32.partialorder %v219, 0.0
    %vm235 = vcmp.gt.f32.partialorder %v222, 0.0
    %vm236 = vcmp.gt.f32.partialorder %v224, 0.0
    %vm237 = vcmp.gt.f32.partialorder %v227, 0.0
    %vm238 = vcmp.gt.f32.partialorder %v229, 0.0
    %v239 = vmul.f32 %v212, 0.01
    %v240 = vmul.f32 %v214, 0.01
    %v241 = vmul.f32 %v217, 0.01
    %v242 = vmul.f32 %v219, 0.01
    %v243 = vmul.f32 %v222, 0.01
    %v244 = vmul.f32 %v224, 0.01
    %v245 = vmul.f32 %v227, 0.01
    %v246 = vmul.f32 %v229, 0.01
    %v247 = vsel %vm231, %v212, %v239
    %v248 = vsel %vm232, %v214, %v240
    %v249 = vsel %vm233, %v217, %v241
    %v250 = vsel %vm234, %v219, %v242
    %v251 = vsel %vm235, %v222, %v243
    %v252 = vsel %vm236, %v224, %v244
    %v253 = vsel %vm237, %v227, %v245
    %v254 = vsel %vm238, %v229, %v246
    %v255 = vld [vmem:[%s4] sm:$0x1]
    %v257 = vperm.slane %v255, 0
    %v259 = vmul.f32 %v247, %v257
    %v260 = vmul.f32 %v248, %v257
    %v261 = vmul.f32 %v249, %v257
    %v262 = vmul.f32 %v250, %v257
    %v263 = vmul.f32 %v251, %v257
    %v264 = vmul.f32 %v252, %v257
    %v265 = vmul.f32 %v253, %v257
    %v266 = vmul.f32 %v254, %v257
    %267 = vadd.xlane.f32.xlu0 %v259
    %v268 = vpop.xlane.xlu0 %267
    %269 = vadd.xlane.f32.xlu0 %v260
    %v270 = vpop.xlane.xlu0 %269
    %271 = vadd.xlane.f32.xlu0 %v261
    %v272 = vpop.xlane.xlu0 %271
    %273 = vadd.xlane.f32.xlu0 %v262
    %v274 = vpop.xlane.xlu0 %273
    %275 = vadd.xlane.f32.xlu0 %v263
    %v276 = vpop.xlane.xlu0 %275
    %277 = vadd.xlane.f32.xlu0 %v264
    %v278 = vpop.xlane.xlu0 %277
    %279 = vadd.xlane.f32.xlu0 %v265
    %v280 = vpop.xlane.xlu0 %279
    %281 = vadd.xlane.f32.xlu0 %v266
    %v282 = vpop.xlane.xlu0 %281
    %s283 = sld [smem:[#allocation2]]
    %v284 = vstv %s283
    %v285 = vadd.f32 %v268, %v284
    %v286 = vadd.f32 %v270, %v284
    %v287 = vadd.f32 %v272, %v284
    %v288 = vadd.f32 %v274, %v284
    %v289 = vadd.f32 %v276, %v284
    %v290 = vadd.f32 %v278, %v284
    %v291 = vadd.f32 %v280, %v284
    %v292 = vadd.f32 %v282, %v284
    %v293 = vld [vmem:[#allocation7] sm:$0xff]
    %vm294 = vcmp.gt.f32.partialorder %v293, 0.0
    %v303 = vlaneseq
    %v304 = vand.u32 %v303, 127
    %v305 = vperm.slane %v285, %v304
    %v306 = vperm.slane %v286, %v304
    %v307 = vperm.slane %v287, %v304
    %v308 = vperm.slane %v288, %v304
    %v309 = vperm.slane %v289, %v304
    %v310 = vperm.slane %v290, %v304
    %v311 = vperm.slane %v291, %v304
    %v312 = vperm.slane %v292, %v304
    %vm313 = vcmask 1041409
    %v314 = vsel %vm313, %v306, %v305
    %vm315 = vcmask 1042434
    %v316 = vsel %vm315, %v307, %v314
    %vm317 = vcmask 1043459
    %v318 = vsel %vm317, %v308, %v316
    %vm319 = vcmask 1044484
    %v320 = vsel %vm319, %v309, %v318
    %vm321 = vcmask 1045509
    %v322 = vsel %vm321, %v310, %v320
    %vm323 = vcmask 1046534
    %v324 = vsel %vm323, %v311, %v322
    %vm325 = vcmask 1047559
    %v326 = vsel %vm325, %v312, %v324
    %v328 = vsel %vm294, %v326, -1e+30
    %vm329 = vcmask 64512
    %v330 = vsel %vm329, %v328, -inf
    %331 = vmax.xlane.f32.xlu0 %v330
    %v332 = vpop.xlane.xlu0 %331
    %v333 = vsub.f32 %v328, %v332
    %v334 = vmul.f32 %v333, 1.442695
    %v335 = vpow.pop %v334
    %v336 = vsel %vm329, %v335, 0.0
    %337 = vadd.xlane.f32.xlu0 %v336
    %v338 = vpop.xlane.xlu0 %337
    %v339 = vrcp.pop %v338
    %v340 = vmul.f32 %v338, %v339
    %v341 = vsub.f32 1.0, %v340
    %v342 = vmul.f32 %v339, %v341
    %v343 = vadd.f32 %v339, %v342
    %vm344 = vweird.f32 %v338
    %vm345 = vweird.f32 %v339
    %vm346 = vmor %vm344, %vm345
    %v347 = vsel %vm346, %v339, %v343
    %v348 = vand.u32 2147483647, %v338
    %vm349 = vcmp.eq.f32.partialorder %v348, 8.507059e+37
    %v350 = vand.u32 %v338, 2147483648
    %v351 = vor.u32 1.1754944e-38, %v350
    %v352 = vsel %vm349, %v351, %v347
    %v353 = vmul.f32 %v335, %v352
    %354 = vxpose.xlu0.b32.start [1/16] %v353, 128
    %355 = vxpose.xlu0.b32.cont [2/16] 0.0, 128
    %356 = vxpose.xlu0.b32.cont [3/16] 0.0, 128
    %357 = vxpose.xlu0.b32.cont [4/16] 0.0, 128
    %358 = vxpose.xlu0.b32.cont [5/16] 0.0, 128
    %359 = vxpose.xlu0.b32.cont [6/16] 0.0, 128
    %360 = vxpose.xlu0.b32.cont [7/16] 0.0, 128
    %361 = vxpose.xlu0.b32.cont [8/16] 0.0, 128
    %362 = vxpose.xlu0.b32.cont [9/16] 0.0, 128
    %363 = vxpose.xlu0.b32.cont [10/16] 0.0, 128
    %364 = vxpose.xlu0.b32.cont [11/16] 0.0, 128
    %365 = vxpose.xlu0.b32.cont [12/16] 0.0, 128
    %366 = vxpose.xlu0.b32.cont [13/16] 0.0, 128
    %367 = vxpose.xlu0.b32.cont [14/16] 0.0, 128
    %368 = vxpose.xlu0.b32.cont [15/16] 0.0, 128
    %369 = vxpose.xlu0.b32.end [16/16] 0.0, 128
    %v370 = vpop.trf.xlu0
    %v371 = vpop.trf.xlu0
    %v372 = vpop.trf.xlu0
    %v373 = vpop.trf.xlu0
    %v374 = vpop.trf.xlu0
    %v375 = vpop.trf.xlu0
    %v376 = vpop.trf.xlu0
    %v377 = vpop.trf.xlu0
    %v378 = vpop.trf.xlu0
    %v379 = vpop.trf.xlu0
    %v380 = vpop.trf.xlu0
    %v381 = vpop.trf.xlu0
    %v382 = vpop.trf.xlu0
    %v383 = vpop.trf.xlu0
    %v384 = vpop.trf.xlu0
    %v385 = vpop.trf.xlu0
    %386 = vst.msk [vmem:[#allocation12] sm:$0xff] %vm329, %v370
    %v387 = vperm.slane %v353, 0
    %v388 = vlaneseq
    %v389 = vshrl.u32 %v388, 7
    %391 = vset.pattern.permute.xlu0 %v389
    %392 = vperm.xlu0 %391, %v387
    %v393 = vpop.permute.xlu0 %392
    %v394 = vperm.slane %v353, 1
    %v395 = vlaneseq
    %v396 = vshrl.u32 %v395, 7
    %398 = vset.pattern.permute.xlu0 %v396
    %399 = vperm.xlu0 %398, %v394
    %v400 = vpop.permute.xlu0 %399
    %v401 = vperm.slane %v353, 2
    %v402 = vlaneseq
    %v403 = vshrl.u32 %v402, 7
    %405 = vset.pattern.permute.xlu0 %v403
    %406 = vperm.xlu0 %405, %v401
    %v407 = vpop.permute.xlu0 %406
    %v408 = vperm.slane %v353, 3
    %v409 = vlaneseq
    %v410 = vshrl.u32 %v409, 7
    %412 = vset.pattern.permute.xlu0 %v410
    %413 = vperm.xlu0 %412, %v408
    %v414 = vpop.permute.xlu0 %413
    %v415 = vperm.slane %v353, 4
    %v416 = vlaneseq
    %v417 = vshrl.u32 %v416, 7
    %419 = vset.pattern.permute.xlu0 %v417
    %420 = vperm.xlu0 %419, %v415
    %v421 = vpop.permute.xlu0 %420
    %v422 = vperm.slane %v353, 5
    %v423 = vlaneseq
    %v424 = vshrl.u32 %v423, 7
    %426 = vset.pattern.permute.xlu0 %v424
    %427 = vperm.xlu0 %426, %v422
    %v428 = vpop.permute.xlu0 %427
    %v429 = vperm.slane %v353, 6
    %v430 = vlaneseq
    %v431 = vshrl.u32 %v430, 7
    %433 = vset.pattern.permute.xlu0 %v431
    %434 = vperm.xlu0 %433, %v429
    %v435 = vpop.permute.xlu0 %434
    %v436 = vperm.slane %v353, 7
    %v437 = vlaneseq
    %v438 = vshrl.u32 %v437, 7
    %440 = vset.pattern.permute.xlu0 %v438
    %441 = vperm.xlu0 %440, %v436
    %v442 = vpop.permute.xlu0 %441
    %v443 = vunpack.c.l.bf16 %v102
    %v444 = vunpack.c.l.bf16 %v103
    %v445 = vunpack.c.l.bf16 %v104
    %v446 = vunpack.c.l.bf16 %v105
    %v447 = vunpack.c.l.bf16 %v106
    %v448 = vunpack.c.l.bf16 %v107
    %v449 = vunpack.c.l.bf16 %v108
    %v450 = vunpack.c.l.bf16 %v109
    %v451 = vmul.f32 %v393, %v443
    %v452 = vmul.f32 %v400, %v444
    %v453 = vmul.f32 %v407, %v445
    %v454 = vmul.f32 %v414, %v446
    %v455 = vmul.f32 %v421, %v447
    %v456 = vmul.f32 %v428, %v448
    %v457 = vmul.f32 %v435, %v449
    %v458 = vmul.f32 %v442, %v450
    %v459 = vrot.slane %v451, 4
    %v460 = vadd.f32 %v451, %v459
    %v461 = vrot.slane %v460, 2
    %v462 = vadd.f32 %v460, %v461
    %v463 = vrot.slane %v462, 1
    %v464 = vadd.f32 %v462, %v463
    %v465 = vrot.slane %v452, 4
    %v466 = vadd.f32 %v452, %v465
    %v467 = vrot.slane %v466, 2
    %v468 = vadd.f32 %v466, %v467
    %v469 = vrot.slane %v468, 1
    %v470 = vadd.f32 %v468, %v469
    %v471 = vrot.slane %v453, 4
    %v472 = vadd.f32 %v453, %v471
    %v473 = vrot.slane %v472, 2
    %v474 = vadd.f32 %v472, %v473
    %v475 = vrot.slane %v474, 1
    %v476 = vadd.f32 %v474, %v475
    %v477 = vrot.slane %v454, 4
    %v478 = vadd.f32 %v454, %v477
    %v479 = vrot.slane %v478, 2
    %v480 = vadd.f32 %v478, %v479
    %v481 = vrot.slane %v480, 1
    %v482 = vadd.f32 %v480, %v481
    %v483 = vrot.slane %v455, 4
    %v484 = vadd.f32 %v455, %v483
    %v485 = vrot.slane %v484, 2
    %v486 = vadd.f32 %v484, %v485
    %v487 = vrot.slane %v486, 1
    %v488 = vadd.f32 %v486, %v487
    %v489 = vrot.slane %v456, 4
    %v490 = vadd.f32 %v456, %v489
    %v491 = vrot.slane %v490, 2
    %v492 = vadd.f32 %v490, %v491
    %v493 = vrot.slane %v492, 1
    %v494 = vadd.f32 %v492, %v493
    %v495 = vrot.slane %v457, 4
    %v496 = vadd.f32 %v457, %v495
    %v497 = vrot.slane %v496, 2
    %v498 = vadd.f32 %v496, %v497
    %v499 = vrot.slane %v498, 1
    %v500 = vadd.f32 %v498, %v499
    %v501 = vrot.slane %v458, 4
    %v502 = vadd.f32 %v458, %v501
    %v503 = vrot.slane %v502, 2
    %v504 = vadd.f32 %v502, %v503
    %v505 = vrot.slane %v504, 1
    %v506 = vadd.f32 %v504, %v505
    %v507 = vld [vmem:[#allocation10] sm:$0xff]
    %v508 = vld [vmem:[#allocation10 + $0x8] sm:$0xff]
    %v509 = vld [vmem:[#allocation10 + $0x10] sm:$0xff]
    %v510 = vld [vmem:[#allocation10 + $0x18] sm:$0xff]
    %v511 = vld [vmem:[#allocation10 + $0x20] sm:$0xff]
    %v512 = vld [vmem:[#allocation10 + $0x28] sm:$0xff]
    %v513 = vld [vmem:[#allocation10 + $0x30] sm:$0xff]
    %v514 = vld [vmem:[#allocation10 + $0x38] sm:$0xff]
    %v515 = vld [vmem:[#allocation10 + $0x40] sm:$0xff]
    %v516 = vld [vmem:[#allocation10 + $0x48] sm:$0xff]
    %v517 = vld [vmem:[#allocation10 + $0x50] sm:$0xff]
    %v518 = vld [vmem:[#allocation10 + $0x58] sm:$0xff]
    %v519 = vld [vmem:[#allocation10 + $0x60] sm:$0xff]
    %v520 = vld [vmem:[#allocation10 + $0x68] sm:$0xff]
    %v521 = vld [vmem:[#allocation10 + $0x70] sm:$0xff]
    %v522 = vld [vmem:[#allocation10 + $0x78] sm:$0xff]
    %v523 = vld [vmem:[%s7] sm:$0x1]
    %v525 = vperm.slane %v523, 0
    %v535 = vsel %vm313, %v470, %v464
    %v536 = vsel %vm315, %v476, %v535
    %v537 = vsel %vm317, %v482, %v536
    %v538 = vsel %vm319, %v488, %v537
    %v539 = vsel %vm321, %v494, %v538
    %v540 = vsel %vm323, %v500, %v539
    %v541 = vsel %vm325, %v506, %v540
    %543 = vmatpush.msra.mxu0 %v522
    %544 = vmatpush.msra.mxu0 %v521
    %545 = vmatpush.msra.mxu0 %v520
    %546 = vmatpush.msra.mxu0 %v519
    %547 = vmatpush.msra.mxu0 %v518
    %548 = vmatpush.msra.mxu0 %v517
    %549 = vmatpush.msra.mxu0 %v516
    %550 = vmatpush.msra.mxu0 %v515
    %551 = vmatpush.msra.mxu0 %v514
    %552 = vmatpush.msra.mxu0 %v513
    %553 = vmatpush.msra.mxu0 %v512
    %554 = vmatpush.msra.mxu0 %v511
    %555 = vmatpush.msra.mxu0 %v510
    %556 = vmatpush.msra.mxu0 %v509
    %557 = vmatpush.msra.mxu0 %v508
    %558 = vmatpush.msra.mxu0 %v507
    %559 = vmatmul.f32.gmra.mxu0 %v541
    %v560 = vpop.f32.mrf.mxu0
    %v561 = vadd.f32 %v525, %v560
    %562 = vdwg.mxu0
    %vm563 = vcmp.gt.f32.partialorder %v561, 0.0
    %v564 = vmul.f32 %v561, 0.01
    %v565 = vsel %vm563, %v561, %v564
    %v566 = vld [vmem:[%s8] sm:$0x1]
    %v568 = vperm.slane %v566, 0
    %v570 = vmul.f32 %v565, %v568
    %571 = vadd.xlane.f32.xlu0 %v570
    %v572 = vpop.xlane.xlu0 %571
    %s573 = sld [smem:[#allocation3]]
    %v574 = vstv %s573
    %v575 = vadd.f32 %v572, %v574
    %v576 = vsub.f32 0.0, %v575
    %v577 = vmul.f32 %v576, 1.442695
    %v578 = vpow.pop %v577
    %v579 = vadd.f32 %v578, 1.0
    %v580 = vrcp.pop %v579
    %v581 = vmul.f32 %v579, %v580
    %v582 = vsub.f32 1.0, %v581
    %v583 = vmul.f32 %v580, %v582
    %v584 = vadd.f32 %v580, %v583
    %vm585 = vweird.f32 %v579
    %vm586 = vweird.f32 %v580
    %vm587 = vmor %vm585, %vm586
    %v588 = vsel %vm587, %v580, %v584
    %v589 = vand.u32 2147483647, %v579
    %vm590 = vcmp.eq.f32.partialorder %v589, 8.507059e+37
    %v591 = vand.u32 %v579, 2147483648
    %v592 = vor.u32 1.1754944e-38, %v591
    %v593 = vsel %vm590, %v592, %v588
    %v594 = vmul.f32 1.0, %v593
    %595 = vxpose.xlu0.b32.start [1/16] %v594, 128
    %596 = vxpose.xlu0.b32.cont [2/16] 0.0, 128
    %597 = vxpose.xlu0.b32.cont [3/16] 0.0, 128
    %598 = vxpose.xlu0.b32.cont [4/16] 0.0, 128
    %599 = vxpose.xlu0.b32.cont [5/16] 0.0, 128
    %600 = vxpose.xlu0.b32.cont [6/16] 0.0, 128
    %601 = vxpose.xlu0.b32.cont [7/16] 0.0, 128
    %602 = vxpose.xlu0.b32.cont [8/16] 0.0, 128
    %603 = vxpose.xlu0.b32.cont [9/16] 0.0, 128
    %604 = vxpose.xlu0.b32.cont [10/16] 0.0, 128
    %605 = vxpose.xlu0.b32.cont [11/16] 0.0, 128
    %606 = vxpose.xlu0.b32.cont [12/16] 0.0, 128
    %607 = vxpose.xlu0.b32.cont [13/16] 0.0, 128
    %608 = vxpose.xlu0.b32.cont [14/16] 0.0, 128
    %609 = vxpose.xlu0.b32.cont [15/16] 0.0, 128
    %610 = vxpose.xlu0.b32.end [16/16] 0.0, 128
    %v611 = vpop.trf.xlu0
    %v612 = vpop.trf.xlu0
    %v613 = vpop.trf.xlu0
    %v614 = vpop.trf.xlu0
    %v615 = vpop.trf.xlu0
    %v616 = vpop.trf.xlu0
    %v617 = vpop.trf.xlu0
    %v618 = vpop.trf.xlu0
    %v619 = vpop.trf.xlu0
    %v620 = vpop.trf.xlu0
    %v621 = vpop.trf.xlu0
    %v622 = vpop.trf.xlu0
    %v623 = vpop.trf.xlu0
    %v624 = vpop.trf.xlu0
    %v625 = vpop.trf.xlu0
    %v626 = vpop.trf.xlu0
    %vm627 = vcmask 57344
    %628 = vst.msk [vmem:[#allocation13] sm:$0x1] %vm627, %v611
    // Predicated region
    $region58: #{tpu_custom_call.1} parent=1 // pred_check
      _
    $region59: #{tpu_custom_call.1} parent=1 // pred_check_branch
      %630 = sbr.rel (0) target = $region61
    $region60: #{tpu_custom_call.1} parent=1 // pred_region
      %632 = vsyncadd [#allocation6], 0
      %s634 = sshll.u32 [#allocation12], 4
      %s635 = int_to_ptr.vmem [resolvable:$true] %s634
      %s636 = sshll.u32 %s10, 4
      %s637 = int_to_ptr.hbm [resolvable:$true] %s636
      %639 = dma.vmem_to_hbm [thread:$0]  %s635, 128, %s637, [#allocation6]
    $region61: #{tpu_custom_call.1} parent=1 // pred_fallthru
      _
    // Predicated region
    $region62: #{tpu_custom_call.1} parent=1 // pred_check
      _
    $region63: #{tpu_custom_call.1} parent=1 // pred_check_branch
      %641 = sbr.rel (0) target = $region65
    $region64: #{tpu_custom_call.1} parent=1 // pred_region
      %643 = vsyncadd [#allocation14], 0
      %s645 = sshll.u32 [#allocation13], 4
      %s646 = int_to_ptr.vmem [resolvable:$true] %s645
      %s647 = sshll.u32 %s11, 4
      %s648 = int_to_ptr.hbm [resolvable:$true] %s647
      %650 = dma.vmem_to_hbm [thread:$0]  %s646, 16, %s648, [#allocation14]
    $region65: #{tpu_custom_call.1} parent=1 // pred_fallthru
      _
    // Predicated region
    $region66: #{tpu_custom_call.1} parent=1 // pred_check
      _
    $region67: #{tpu_custom_call.1} parent=1 // pred_check_branch
      %652 = sbr.rel (0) target = $region69
    $region68: #{tpu_custom_call.1} parent=1 // pred_region
      %654 = dma.done [#allocation6], 128
    $region69: #{tpu_custom_call.1} parent=1 // pred_fallthru
      _
    // Predicated region
    $region70: #{tpu_custom_call.1} parent=1 // pred_check
      _
    $region71: #{tpu_custom_call.1} parent=1 // pred_check_branch
      %656 = sbr.rel (0) target = $region73
    $region72: #{tpu_custom_call.1} parent=1 // pred_region
      %658 = dma.done [#allocation14], 16
    $region73: #{tpu_custom_call.1} parent=1 // pred_fallthru
      _
    %659 = vsyncpa [#allocation5], 1
    %660 = vsyncpa [#allocation8], 1
    %661 = vsyncpa [#allocation11], 1
    %662 = vsyncpa [#allocation6], 1
    %663 = vsyncpa [#allocation14], 1

</llo_original>
